<compile_context>
chip_gen: v5e
topology: v5e:2x2
jax: 0.10.0
libtpu: 0.0.40
codegen_flags: <defaults>
</compile_context>

<pallas_src>
import jax
import jax.numpy as jnp
from jax.experimental import pallas as pl
from jax.experimental.pallas import tpu as pltpu


LANE = 128
SUBLANE = 8


def _round_up(x, m):
    return ((x + m - 1) // m) * m


def gruey_kernel(x_ref, w_in_ref, b_in_ref, w_hg_ref, w_out_ref, b_out_ref, o_ref):
    # x tile: (TM, F) f32, unpadded in the lane dim -> bf16 for the MXU.
    x = x_ref[...].astype(jnp.bfloat16)

    # input_fc + ReLU (dropout_rate = 0.0 -> identity). f32 accumulation.
    h = jnp.dot(x, w_in_ref[...], preferred_element_type=jnp.float32) + b_in_ref[...]
    h = jnp.maximum(h, 0.0)                                            # (TM, Hp) f32

    # minGRU, seq_len == 1, no previous hidden state, proj_out=False.
    # Fused hidden/gate matmul: one MXU pass producing a 2*Hp-lane result.
    hg = jnp.dot(h.astype(jnp.bfloat16), w_hg_ref[...],
                 preferred_element_type=jnp.float32)                   # (TM, 2*Hp) f32
    hp = w_hg_ref.shape[1] // 2                                        # static, lane-aligned
    hidden = hg[:, :hp]
    gate = hg[:, hp:]

    # Epilogue in f32 (v5e has no bf16 VPU/EUP). Padded lanes are free filler here.
    hidden = jnp.where(hidden >= 0.0, hidden + 0.5, jax.nn.sigmoid(hidden))  # g(.)
    gate = jax.nn.sigmoid(gate)
    gru_out = hidden * gate                                            # (TM, Hp) f32

    # output_fc: matmul against the padded W_out, then slice the real O columns
    # for a lane-unpadded (TM, O) store (masked vst is negligible vs 128x writeback).
    y = jnp.dot(gru_out.astype(jnp.bfloat16), w_out_ref[...],
                preferred_element_type=jnp.float32)                    # (TM, Op) f32
    o = o_ref.shape[-1]
    o_ref[...] = (y[:, :o] + b_out_ref[...]).astype(o_ref.dtype)


def init_params(key, input_dim, gru_dim, output_dim):
    """Deterministic init mimicking torch.nn.Linear uniform(-1/sqrt(fan_in), 1/sqrt(fan_in))."""
    ks = jax.random.split(key, 6)

    def unif(k, shape, fan_in):
        bound = 1.0 / jnp.sqrt(fan_in)
        return jax.random.uniform(k, shape, jnp.float32, -bound, bound)

    w_in = unif(ks[0], (input_dim, gru_dim), input_dim)       # input_fc.weight (transposed)
    b_in = unif(ks[1], (1, gru_dim), input_dim)               # input_fc.bias
    # minGRU.to_hidden_and_gate: Linear(gru_dim, 2*gru_dim, bias=False) -> W_h, W_g halves
    w_h = unif(ks[2], (gru_dim, gru_dim), gru_dim)
    w_g = unif(ks[3], (gru_dim, gru_dim), gru_dim)
    w_out = unif(ks[4], (gru_dim, output_dim), gru_dim)       # output_fc.weight (transposed)
    b_out = unif(ks[5], (1, output_dim), gru_dim)             # output_fc.bias
    return (w_in, b_in, w_h, w_g, w_out, b_out)


def prepare_params(params):
    """Zero-pad weight lane dims to multiples of 128 once, fuse W_h|W_g, cast MXU weights to bf16.

    Activations (x) and the output / output bias are deliberately left unpadded.
    """
    w_in, b_in, w_h, w_g, w_out, b_out = params
    input_dim, gru_dim = w_in.shape
    output_dim = w_out.shape[1]
    hp = _round_up(gru_dim, LANE)
    op = _round_up(output_dim, LANE)

    def pad2(a, rows, cols):
        return jnp.pad(a, ((0, rows - a.shape[0]), (0, cols - a.shape[1])))

    w_in_p = pad2(w_in, input_dim, hp).astype(jnp.bfloat16)                # (F,  Hp)
    b_in_p = pad2(b_in, 1, hp)                                             # (1,  Hp) f32
    w_hg_p = jnp.concatenate([pad2(w_h, hp, hp), pad2(w_g, hp, hp)],
                             axis=1).astype(jnp.bfloat16)                  # (Hp, 2Hp)
    w_out_p = pad2(w_out, hp, op).astype(jnp.bfloat16)                     # (Hp, Op)
    b_out_p = b_out                                                        # (1,  O)  f32, unpadded
    return (w_in_p, b_in_p, w_hg_p, w_out_p, b_out_p)


@jax.jit
def gruey_forward(x, prepared):
    """x: (B, input_dim) float32.  Returns (B, output_dim) float32."""
    w_in_p, b_in_p, w_hg_p, w_out_p, b_out_p = prepared
    B, F = x.shape
    hp = w_in_p.shape[1]
    op = w_out_p.shape[1]
    out_dim = b_out_p.shape[1]

    # Rows padded only to a sublane multiple (at most 7 extra rows); no lane padding.
    Bp = _round_up(B, SUBLANE)
    if Bp != B:
        x = jnp.pad(x, ((0, Bp - B), (0, 0)))

    # Big batch tiles amortize the ~0.35 us/step grid overhead; per-step VMEM use
    # (~130 KiB resident weights + double-buffered (TM,F)/(TM,O) tiles) stays ~1 MiB
    # even at TM=2048, far below every generation's VMEM. cdiv grid -> no 512-row pad.
    TM = min(Bp, 2048)
    grid = (pl.cdiv(Bp, TM),)

    flops = 2 * Bp * (F * hp + hp * (2 * hp) + hp * op)
    transcendentals = 2 * Bp * hp
    bytes_accessed = (Bp * F * 4 + Bp * out_dim * 4
                      + (w_in_p.size + w_hg_p.size + w_out_p.size) * 2
                      + (b_in_p.size + b_out_p.size) * 4)

    out = pl.pallas_call(
        gruey_kernel,
        out_shape=jax.ShapeDtypeStruct((Bp, out_dim), jnp.float32),
        grid_spec=pltpu.PrefetchScalarGridSpec(
            num_scalar_prefetch=0,
            grid=grid,
            in_specs=[
                pl.BlockSpec((TM, F), lambda i: (i, 0)),          # x tile, unpadded lanes (pipelined)
                pl.BlockSpec((F, hp), lambda i: (0, 0)),          # W_in    (resident)
                pl.BlockSpec((1, hp), lambda i: (0, 0)),          # b_in    (resident)
                pl.BlockSpec((hp, 2 * hp), lambda i: (0, 0)),     # W_h|W_g fused (resident)
                pl.BlockSpec((hp, op), lambda i: (0, 0)),         # W_out   (resident)
                pl.BlockSpec((1, out_dim), lambda i: (0, 0)),     # b_out   (resident, unpadded)
            ],
            out_specs=pl.BlockSpec((TM, out_dim), lambda i: (i, 0)),  # unpadded (TM, O) output tile
        ),
        compiler_params=pltpu.CompilerParams(
            dimension_semantics=("parallel",),    # shard batch tiles across v7x's 2 TCs
        ),
        cost_estimate=pl.CostEstimate(
            flops=flops,
            transcendentals=transcendentals,
            bytes_accessed=bytes_accessed,
        ),
    )(x, w_in_p, b_in_p, w_hg_p, w_out_p, b_out_p)

    return out[:B]


def gruey_reference(x, params):
    """Pure-JAX reference with the same bf16-MXU / f32-accumulate precision policy."""
    w_in, b_in, w_h, w_g, w_out, b_out = params
    bf = jnp.bfloat16
    h = jnp.dot(x.astype(bf), w_in.astype(bf), preferred_element_type=jnp.float32) + b_in
    h = jnp.maximum(h, 0.0)
    hidden = jnp.dot(h.astype(bf), w_h.astype(bf), preferred_element_type=jnp.float32)
    gate = jnp.dot(h.astype(bf), w_g.astype(bf), preferred_element_type=jnp.float32)
    hidden = jnp.where(hidden >= 0.0, hidden + 0.5, jax.nn.sigmoid(hidden))
    out = jax.nn.sigmoid(gate) * hidden
    return jnp.dot(out.astype(bf), w_out.astype(bf), preferred_element_type=jnp.float32) + b_out


if __name__ == "__main__":
    batch = 8
    input_dim = 16
    gru_dim = 32
    output_dim = 1

    key = jax.random.PRNGKey(0)
    kx, kp = jax.random.split(key)
    x = jax.random.normal(kx, (batch, input_dim), dtype=jnp.float32)
    params = init_params(kp, input_dim, gru_dim, output_dim)
    prepared = prepare_params(params)

    y = gruey_forward(x, prepared)
    jax.block_until_ready(y)

    y_ref = gruey_reference(x, params)
    assert y.shape == (batch, output_dim)
    assert jnp.allclose(y, y_ref, atol=1e-4, rtol=1e-4), "Pallas output mismatch vs reference"

    print("KERNEL_OK")
</pallas_src>

<mosaic_0001>
module attributes {stable_mosaic.version = 11 : i64} {
  func.func @gruey_kernel(%arg0: i32, %arg1: memref<8x16xf32, #tpu.memory_space<vmem>>, %arg2: memref<16x128xbf16, #tpu.memory_space<vmem>>, %arg3: memref<1x128xf32, #tpu.memory_space<vmem>>, %arg4: memref<128x256xbf16, #tpu.memory_space<vmem>>, %arg5: memref<128x128xbf16, #tpu.memory_space<vmem>>, %arg6: memref<1x1xf32, #tpu.memory_space<vmem>>, %arg7: memref<8x1xf32, #tpu.memory_space<vmem>>) attributes {dimension_semantics = [#tpu.dimension_semantics<parallel>], iteration_bounds = array<i64: 1>, scalar_prefetch = 0 : i64, scratch_operands = 0 : i64, tpu.core_type = #tpu.core_type<tc>, window_params = [{transform_indices = @transform_0, window_bounds = array<i64: 8, 16>}, {pipeline_mode = #tpu.pipeline_mode<synchronous>, transform_indices = @transform_1, window_bounds = array<i64: 16, 128>}, {pipeline_mode = #tpu.pipeline_mode<synchronous>, transform_indices = @transform_2, window_bounds = array<i64: 1, 128>}, {pipeline_mode = #tpu.pipeline_mode<synchronous>, transform_indices = @transform_3, window_bounds = array<i64: 128, 256>}, {pipeline_mode = #tpu.pipeline_mode<synchronous>, transform_indices = @transform_4, window_bounds = array<i64: 128, 128>}, {pipeline_mode = #tpu.pipeline_mode<synchronous>, transform_indices = @transform_5, window_bounds = array<i64: 1, 1>}, {transform_indices = @transform_6, window_bounds = array<i64: 8, 1>}]} {
    %c0 = arith.constant 0 : index
    %c0_0 = arith.constant 0 : index
    %0 = vector.load %arg1[%c0, %c0_0] : memref<8x16xf32, #tpu.memory_space<vmem>>, vector<8x16xf32>
    %1 = arith.truncf %0 : vector<8x16xf32> to vector<8x16xbf16>
    %c0_1 = arith.constant 0 : index
    %c0_2 = arith.constant 0 : index
    %2 = vector.load %arg2[%c0_1, %c0_2] : memref<16x128xbf16, #tpu.memory_space<vmem>>, vector<16x128xbf16>
    %cst = arith.constant dense<0.000000e+00> : vector<8x128xf32>
    %3 = tpu.matmul %1, %2, %cst {dimension_numbers = #tpu.dot_dimension_numbers<[1], [0], [0], [1], [0, 0, 1, 1], [], []>} : vector<8x16xbf16>, vector<16x128xbf16>, vector<8x128xf32> -> vector<8x128xf32>
    %c0_3 = arith.constant 0 : index
    %c0_4 = arith.constant 0 : index
    %4 = vector.load %arg3[%c0_3, %c0_4] : memref<1x128xf32, #tpu.memory_space<vmem>>, vector<1x128xf32>
    %5 = vector.broadcast %4 : vector<1x128xf32> to vector<8x128xf32>
    %6 = arith.addf %3, %5 : vector<8x128xf32>
    %cst_5 = arith.constant 0.000000e+00 : f32
    %7 = vector.broadcast %cst_5 : f32 to vector<8x128xf32>
    %8 = arith.maximumf %6, %7 : vector<8x128xf32>
    %9 = arith.truncf %8 : vector<8x128xf32> to vector<8x128xbf16>
    %c0_6 = arith.constant 0 : index
    %c0_7 = arith.constant 0 : index
    %10 = vector.load %arg4[%c0_6, %c0_7] : memref<128x256xbf16, #tpu.memory_space<vmem>>, vector<128x256xbf16>
    %cst_8 = arith.constant dense<0.000000e+00> : vector<8x256xf32>
    %11 = tpu.matmul %9, %10, %cst_8 {dimension_numbers = #tpu.dot_dimension_numbers<[1], [0], [0], [1], [0, 0, 1, 1], [], []>} : vector<8x128xbf16>, vector<128x256xbf16>, vector<8x256xf32> -> vector<8x256xf32>
    %12 = vector.extract_strided_slice %11 {offsets = [0, 0], sizes = [8, 128], strides = [1, 1]} : vector<8x256xf32> to vector<8x128xf32>
    %13 = vector.extract_strided_slice %11 {offsets = [0, 128], sizes = [8, 128], strides = [1, 1]} : vector<8x256xf32> to vector<8x128xf32>
    %cst_9 = arith.constant 0.000000e+00 : f32
    %14 = vector.broadcast %cst_9 : f32 to vector<8x128xf32>
    %15 = arith.cmpf oge, %12, %14 : vector<8x128xf32>
    %cst_10 = arith.constant 5.000000e-01 : f32
    %16 = vector.broadcast %cst_10 : f32 to vector<8x128xf32>
    %17 = arith.addf %12, %16 : vector<8x128xf32>
    %18 = arith.negf %12 : vector<8x128xf32>
    %19 = math.exp %18 : vector<8x128xf32>
    %cst_11 = arith.constant 1.000000e+00 : f32
    %20 = vector.broadcast %cst_11 : f32 to vector<8x128xf32>
    %21 = arith.addf %20, %19 : vector<8x128xf32>
    %22 = arith.divf %20, %21 : vector<8x128xf32>
    %23 = arith.select %15, %17, %22 : vector<8x128xi1>, vector<8x128xf32>
    %24 = arith.negf %13 : vector<8x128xf32>
    %25 = math.exp %24 : vector<8x128xf32>
    %cst_12 = arith.constant 1.000000e+00 : f32
    %26 = vector.broadcast %cst_12 : f32 to vector<8x128xf32>
    %27 = arith.addf %26, %25 : vector<8x128xf32>
    %28 = arith.divf %26, %27 : vector<8x128xf32>
    %29 = arith.mulf %23, %28 : vector<8x128xf32>
    %30 = arith.truncf %29 : vector<8x128xf32> to vector<8x128xbf16>
    %c0_13 = arith.constant 0 : index
    %c0_14 = arith.constant 0 : index
    %31 = vector.load %arg5[%c0_13, %c0_14] : memref<128x128xbf16, #tpu.memory_space<vmem>>, vector<128x128xbf16>
    %cst_15 = arith.constant dense<0.000000e+00> : vector<8x128xf32>
    %32 = tpu.matmul %30, %31, %cst_15 {dimension_numbers = #tpu.dot_dimension_numbers<[1], [0], [0], [1], [0, 0, 1, 1], [], []>} : vector<8x128xbf16>, vector<128x128xbf16>, vector<8x128xf32> -> vector<8x128xf32>
    %33 = vector.extract_strided_slice %32 {offsets = [0, 0], sizes = [8, 1], strides = [1, 1]} : vector<8x128xf32> to vector<8x1xf32>
    %c0_16 = arith.constant 0 : index
    %c0_17 = arith.constant 0 : index
    %34 = vector.load %arg6[%c0_16, %c0_17] : memref<1x1xf32, #tpu.memory_space<vmem>>, vector<1x1xf32>
    %35 = vector.broadcast %34 : vector<1x1xf32> to vector<8x1xf32>
    %36 = arith.addf %33, %35 : vector<8x1xf32>
    %c0_18 = arith.constant 0 : index
    %c0_19 = arith.constant 0 : index
    %37 = vector.load %arg7[%c0_18, %c0_19] : memref<8x1xf32, #tpu.memory_space<vmem>>, vector<8x1xf32>
    tpu.vector_store %arg7[%c0_18, %c0_19], %36 {strides = array<i32>} : memref<8x1xf32, #tpu.memory_space<vmem>>, vector<8x1xf32>,
    return
  }
  func.func @transform_0(%arg0: i32) -> (i32, i32) {
    %c0_i32 = arith.constant 0 : i32
    %c0_i32_0 = arith.constant 0 : i32
    return %arg0, %c0_i32 : i32, i32
  }
  func.func @transform_1(%arg0: i32) -> (i32, i32) {
    %c0_i32 = arith.constant 0 : i32
    %c0_i32_0 = arith.constant 0 : i32
    %c0_i32_1 = arith.constant 0 : i32
    return %c0_i32, %c0_i32_0 : i32, i32
  }
  func.func @transform_2(%arg0: i32) -> (i32, i32) {
    %c0_i32 = arith.constant 0 : i32
    %c0_i32_0 = arith.constant 0 : i32
    %c0_i32_1 = arith.constant 0 : i32
    return %c0_i32, %c0_i32_0 : i32, i32
  }
  func.func @transform_3(%arg0: i32) -> (i32, i32) {
    %c0_i32 = arith.constant 0 : i32
    %c0_i32_0 = arith.constant 0 : i32
    %c0_i32_1 = arith.constant 0 : i32
    return %c0_i32, %c0_i32_0 : i32, i32
  }
  func.func @transform_4(%arg0: i32) -> (i32, i32) {
    %c0_i32 = arith.constant 0 : i32
    %c0_i32_0 = arith.constant 0 : i32
    %c0_i32_1 = arith.constant 0 : i32
    return %c0_i32, %c0_i32_0 : i32, i32
  }
  func.func @transform_5(%arg0: i32) -> (i32, i32) {
    %c0_i32 = arith.constant 0 : i32
    %c0_i32_0 = arith.constant 0 : i32
    %c0_i32_1 = arith.constant 0 : i32
    return %c0_i32, %c0_i32_0 : i32, i32
  }
  func.func @transform_6(%arg0: i32) -> (i32, i32) {
    %c0_i32 = arith.constant 0 : i32
    %c0_i32_0 = arith.constant 0 : i32
    return %arg0, %c0_i32 : i32, i32
  }
}

</mosaic_0001>

<llo_original>
// kernel: gruey_forward.1
$region0: #{gruey_forward.1}
  #allocation0 [shape = 'u32[]', space=smem, size = 0x4, offset = 0x4, fixed_abs, tag = 'smem constant byte address 0x4 - core index']
  #allocation1 [shape = 'u32[72,128]{1,0:T(1,128)}', space=vmem, size = 0x9000, scoped, tag = 'internal scratch']
  #allocation2 [shape = 'f32[1,1]{1,0:T(1,128)S(1)}', space=vmem, size = 0x200, scoped, tag = 'scoped memory for gruey_forward.1']
  %s0 = inlined_call_operand.hbm [shape: f32[8,16], index: 0, kind: input, shape index: {}]
  %s1 = inlined_call_operand.hbm [shape: bf16[16,128], index: 1, kind: input, shape index: {}]
  %s2 = inlined_call_operand.vmem [shape: f32[1,128], index: 2, kind: input, shape index: {}]
  %s3 = inlined_call_operand.hbm [shape: bf16[128,256], index: 3, kind: input, shape index: {}]
  %s4 = inlined_call_operand.hbm [shape: bf16[128,128], index: 4, kind: input, shape index: {}]
  %s5 = inlined_call_operand.<no memory space> [shape: f32[1,1], index: 5, kind: input, shape index: {}]
  %s6 = inlined_call_operand.vmem [shape: f32[8,1], index: 6, kind: output, shape index: {}]
  %s7 = sld [smem:[#allocation0]]
  $region50: #{gruey_forward.1} parent=0
    _
  %s9 = ssub.s32 1, %s7
  %s10 = scalar_select 0, %s9, %s7
  %v11 = vstv %s5
  %12 = vst [vmem:[#allocation2] sm:$0x1] %v11
  $region1: #{gruey_forward.1} parent=0
    #allocation3 [shape = 'u8[4096]{0}', space=vmem, size = 0x1000, scoped, tag = 'input window, operand 0, single buffered']
    #allocation4 [shape = 's32[1]{0}', space=sflag, size = 0x4, scoped, tag = 'scoped memory for gruey_forward.1']
    #allocation5 [shape = 'u8[4096]{0}', space=vmem, size = 0x1000, scoped, tag = 'input window, operand 1, single buffered']
    #allocation6 [shape = 's32[1]{0}', space=sflag, size = 0x4, scoped, tag = 'scoped memory for gruey_forward.1']
    #allocation7 [shape = 'u8[65536]{0}', space=vmem, size = 0x10000, scoped, tag = 'input window, operand 3, single buffered']
    #allocation8 [shape = 'u8[32768]{0}', space=vmem, size = 0x8000, scoped, tag = 'input window, operand 4, single buffered']
    #allocation9 [shape = 's32[1]{0}', space=sflag, size = 0x4, scoped, tag = 'scoped memory for gruey_forward.1']
    %13 = vsyncpa [#allocation4], 0
    %14 = vsyncpa [#allocation6], 0
    %15 = vsyncpa [#allocation9], 0
    // Predicated region
    $region2: #{gruey_forward.1} parent=1 // pred_check
      _
    $region3: #{gruey_forward.1} parent=1 // pred_check_branch
      %17 = sbr.rel (0) target = $region5
    $region4: #{gruey_forward.1} parent=1 // pred_region
      %19 = vsyncadd [#allocation4], 0
      %s21 = sshll.u32 %s0, 4
      %s22 = int_to_ptr.hbm [resolvable:$true] %s21
      %s23 = sshll.u32 [#allocation3], 4
      %s24 = int_to_ptr.vmem [resolvable:$true] %s23
      %26 = dma.hbm_to_vmem [thread:$0]  %s22, 128, %s24, [#allocation4]
    $region5: #{gruey_forward.1} parent=1 // pred_fallthru
      _
    // Predicated region
    $region6: #{gruey_forward.1} parent=1 // pred_check
      _
    $region7: #{gruey_forward.1} parent=1 // pred_check_branch
      %28 = sbr.rel (0) target = $region9
    $region8: #{gruey_forward.1} parent=1 // pred_region
      %30 = vsyncadd [#allocation6], 0
      %s31 = sshll.u32 %s1, 4
      %s32 = int_to_ptr.hbm [resolvable:$true] %s31
      %s33 = sshll.u32 [#allocation5], 4
      %s34 = int_to_ptr.vmem [resolvable:$true] %s33
      %39 = dma.hbm_to_vmem [thread:$0]  %s32, 128, %s34, [#allocation6], 64, 64, 4
    $region9: #{gruey_forward.1} parent=1 // pred_fallthru
      _
    // Predicated region
    $region10: #{gruey_forward.1} parent=1 // pred_check
      _
    $region11: #{gruey_forward.1} parent=1 // pred_check_branch
      %41 = sbr.rel (0) target = $region13
    $region12: #{gruey_forward.1} parent=1 // pred_region
      _
    $region13: #{gruey_forward.1} parent=1 // pred_fallthru
      _
    // Predicated region
    $region14: #{gruey_forward.1} parent=1 // pred_check
      _
    $region15: #{gruey_forward.1} parent=1 // pred_check_branch
      %43 = sbr.rel (0) target = $region17
    $region16: #{gruey_forward.1} parent=1 // pred_region
      %45 = vsyncadd [#allocation6], 0
      %s46 = sshll.u32 %s3, 4
      %s47 = int_to_ptr.hbm [resolvable:$true] %s46
      %s48 = sshll.u32 [#allocation7], 4
      %s49 = int_to_ptr.vmem [resolvable:$true] %s48
      %54 = dma.hbm_to_vmem [thread:$0]  %s47, 2048, %s49, [#allocation6], 128, 128, 8
    $region17: #{gruey_forward.1} parent=1 // pred_fallthru
      _
    // Predicated region
    $region18: #{gruey_forward.1} parent=1 // pred_check
      _
    $region19: #{gruey_forward.1} parent=1 // pred_check_branch
      %56 = sbr.rel (0) target = $region21
    $region20: #{gruey_forward.1} parent=1 // pred_region
      %58 = vsyncadd [#allocation9], 0
      %s59 = sshll.u32 %s4, 4
      %s60 = int_to_ptr.hbm [resolvable:$true] %s59
      %s61 = sshll.u32 [#allocation8], 4
      %s62 = int_to_ptr.vmem [resolvable:$true] %s61
      %67 = dma.hbm_to_vmem [thread:$0]  %s60, 1024, %s62, [#allocation9], 64, 64, 4
    $region21: #{gruey_forward.1} parent=1 // pred_fallthru
      _
    // Predicated region
    $region22: #{gruey_forward.1} parent=1 // pred_check
      _
    $region23: #{gruey_forward.1} parent=1 // pred_check_branch
      %69 = sbr.rel (0) target = $region25
    $region24: #{gruey_forward.1} parent=1 // pred_region
      _
    $region25: #{gruey_forward.1} parent=1 // pred_fallthru
      _
    // Predicated region
    $region26: #{gruey_forward.1} parent=1 // pred_check
      _
    $region27: #{gruey_forward.1} parent=1 // pred_check_branch
      %71 = sbr.rel (0) target = $region29
    $region28: #{gruey_forward.1} parent=1 // pred_region
      %73 = dma.done [#allocation4], 128
    $region29: #{gruey_forward.1} parent=1 // pred_fallthru
      _
    // Predicated region
    $region30: #{gruey_forward.1} parent=1 // pred_check
      _
    $region31: #{gruey_forward.1} parent=1 // pred_check_branch
      %75 = sbr.rel (0) target = $region33
    $region32: #{gruey_forward.1} parent=1 // pred_region
      %77 = dma.done [#allocation6], 128
    $region33: #{gruey_forward.1} parent=1 // pred_fallthru
      _
    // Predicated region
    $region34: #{gruey_forward.1} parent=1 // pred_check
      _
    $region35: #{gruey_forward.1} parent=1 // pred_check_branch
      %79 = sbr.rel (0) target = $region37
    $region36: #{gruey_forward.1} parent=1 // pred_region
      %81 = dma.done [#allocation6], 2048
    $region37: #{gruey_forward.1} parent=1 // pred_fallthru
      _
    // Predicated region
    $region38: #{gruey_forward.1} parent=1 // pred_check
      _
    $region39: #{gruey_forward.1} parent=1 // pred_check_branch
      %83 = sbr.rel (0) target = $region41
    $region40: #{gruey_forward.1} parent=1 // pred_region
      %85 = dma.done [#allocation9], 1024
    $region41: #{gruey_forward.1} parent=1 // pred_fallthru
      _
    %v87 = vld [vmem:[#allocation3] sm:$0xff]
    %v88 = vpack.c.bf16 %v87, %v87
    %v89 = vld [vmem:[#allocation5] sm:$0xf]
    %v90 = vld [vmem:[#allocation5 + $0x4] sm:$0xf]
    %v91 = vld [vmem:[%s2] sm:$0x1]
    %v93 = vperm.slane %v91, 0
    %v97 = vunpack.c.l.b16 %v89
    %v98 = vunpack.c.l.b16 %v90
    %v99 = vpack.c.b16 %v98, %v97
    %vm101 = vcmask 130048
    %v103 = vsel %vm101, %v88, 0
    %105 = vmatpush.bf16.msra.mxu0 0
    %106 = vmatpush.bf16.msra.mxu0 0
    %107 = vmatpush.bf16.msra.mxu0 0
    %108 = vmatpush.bf16.msra.mxu0 0
    %109 = vmatpush.bf16.msra.mxu0 0
    %110 = vmatpush.bf16.msra.mxu0 0
    %111 = vmatpush.bf16.msra.mxu0 0
    %112 = vmatpush.bf16.msra.mxu0 %v99
    %113 = vmatmul.bf16.gmra.mxu0 %v103
    %v114 = vpop.f32.mrf.mxu0
    %v115 = vadd.f32 %v93, %v114
    %v116 = vpop.f32.mrf.mxu0
    %117 = vdwg.mxu0
    %v118 = vmax.f32 %v115, 0.0
    %v119 = vpack.c.bf16 %v118, %v118
    %v120 = vld [vmem:[#allocation7] sm:$0xff]
    %v121 = vld [vmem:[#allocation7 + $0x8] sm:$0xff]
    %v122 = vld [vmem:[#allocation7 + $0x10] sm:$0xff]
    %v123 = vld [vmem:[#allocation7 + $0x18] sm:$0xff]
    %v124 = vld [vmem:[#allocation7 + $0x20] sm:$0xff]
    %v125 = vld [vmem:[#allocation7 + $0x28] sm:$0xff]
    %v126 = vld [vmem:[#allocation7 + $0x30] sm:$0xff]
    %v127 = vld [vmem:[#allocation7 + $0x38] sm:$0xff]
    %v128 = vld [vmem:[#allocation7 + $0x40] sm:$0xff]
    %v129 = vld [vmem:[#allocation7 + $0x48] sm:$0xff]
    %v130 = vld [vmem:[#allocation7 + $0x50] sm:$0xff]
    %v131 = vld [vmem:[#allocation7 + $0x58] sm:$0xff]
    %v132 = vld [vmem:[#allocation7 + $0x60] sm:$0xff]
    %v133 = vld [vmem:[#allocation7 + $0x68] sm:$0xff]
    %v134 = vld [vmem:[#allocation7 + $0x70] sm:$0xff]
    %v135 = vld [vmem:[#allocation7 + $0x78] sm:$0xff]
    %v152 = vunpack.c.l.b16 %v120
    %v153 = vunpack.c.h.b16 %v120
    %v154 = vunpack.c.l.b16 %v121
    %v155 = vunpack.c.h.b16 %v121
    %v156 = vunpack.c.l.b16 %v122
    %v157 = vunpack.c.h.b16 %v122
    %v158 = vunpack.c.l.b16 %v123
    %v159 = vunpack.c.h.b16 %v123
    %v160 = vunpack.c.l.b16 %v124
    %v161 = vunpack.c.h.b16 %v124
    %v162 = vunpack.c.l.b16 %v125
    %v163 = vunpack.c.h.b16 %v125
    %v164 = vunpack.c.l.b16 %v126
    %v165 = vunpack.c.h.b16 %v126
    %v166 = vunpack.c.l.b16 %v127
    %v167 = vunpack.c.h.b16 %v127
    %v168 = vunpack.c.l.b16 %v128
    %v169 = vunpack.c.h.b16 %v128
    %v170 = vunpack.c.l.b16 %v129
    %v171 = vunpack.c.h.b16 %v129
    %v172 = vunpack.c.l.b16 %v130
    %v173 = vunpack.c.h.b16 %v130
    %v174 = vunpack.c.l.b16 %v131
    %v175 = vunpack.c.h.b16 %v131
    %v176 = vunpack.c.l.b16 %v132
    %v177 = vunpack.c.h.b16 %v132
    %v178 = vunpack.c.l.b16 %v133
    %v179 = vunpack.c.h.b16 %v133
    %v180 = vunpack.c.l.b16 %v134
    %v181 = vunpack.c.h.b16 %v134
    %v182 = vunpack.c.l.b16 %v135
    %v183 = vunpack.c.h.b16 %v135
    %v184 = vpack.c.b16 %v154, %v152
    %v185 = vpack.c.b16 %v155, %v153
    %v186 = vpack.c.b16 %v158, %v156
    %v187 = vpack.c.b16 %v159, %v157
    %v188 = vpack.c.b16 %v162, %v160
    %v189 = vpack.c.b16 %v163, %v161
    %v190 = vpack.c.b16 %v166, %v164
    %v191 = vpack.c.b16 %v167, %v165
    %v192 = vpack.c.b16 %v170, %v168
    %v193 = vpack.c.b16 %v171, %v169
    %v194 = vpack.c.b16 %v174, %v172
    %v195 = vpack.c.b16 %v175, %v173
    %v196 = vpack.c.b16 %v178, %v176
    %v197 = vpack.c.b16 %v179, %v177
    %v198 = vpack.c.b16 %v182, %v180
    %v199 = vpack.c.b16 %v183, %v181
    %216 = vmatpush.bf16.msra.mxu0 %v198
    %217 = vmatpush.bf16.msra.mxu0 %v196
    %218 = vmatpush.bf16.msra.mxu0 %v194
    %219 = vmatpush.bf16.msra.mxu0 %v192
    %220 = vmatpush.bf16.msra.mxu0 %v190
    %221 = vmatpush.bf16.msra.mxu0 %v188
    %222 = vmatpush.bf16.msra.mxu0 %v186
    %223 = vmatpush.bf16.msra.mxu0 %v184
    %224 = vmatmul.bf16.gmra.mxu0 %v119
    %v225 = vpop.f32.mrf.mxu0
    %v226 = vadd.f32 0.0, %v225
    %v227 = vpop.f32.mrf.mxu0
    %228 = vdwg.mxu0
    %229 = vmatpush.bf16.msra.mxu0 %v199
    %230 = vmatpush.bf16.msra.mxu0 %v197
    %231 = vmatpush.bf16.msra.mxu0 %v195
    %232 = vmatpush.bf16.msra.mxu0 %v193
    %233 = vmatpush.bf16.msra.mxu0 %v191
    %234 = vmatpush.bf16.msra.mxu0 %v189
    %235 = vmatpush.bf16.msra.mxu0 %v187
    %236 = vmatpush.bf16.msra.mxu0 %v185
    %237 = vmatmul.bf16.gmra.mxu0 %v119
    %v238 = vpop.f32.mrf.mxu0
    %v239 = vadd.f32 0.0, %v238
    %v240 = vpop.f32.mrf.mxu0
    %241 = vdwg.mxu0
    %vm242 = vcmp.ge.f32.partialorder %v226, 0.0
    %v243 = vadd.f32 %v226, 0.5
    %v244 = vxor.u32 %v226, 2147483648
    %v245 = vmul.f32 %v244, 1.442695
    %v246 = vpow.pop %v245
    %v247 = vadd.f32 %v246, 1.0
    %v248 = vrcp.pop %v247
    %v249 = vmul.f32 %v247, %v248
    %v250 = vsub.f32 1.0, %v249
    %v251 = vmul.f32 %v248, %v250
    %v252 = vadd.f32 %v248, %v251
    %vm253 = vweird.f32 %v247
    %vm254 = vweird.f32 %v248
    %vm255 = vmor %vm253, %vm254
    %v256 = vsel %vm255, %v248, %v252
    %v257 = vand.u32 2147483647, %v247
    %vm258 = vcmp.eq.f32.partialorder %v257, 8.507059e+37
    %v259 = vand.u32 %v247, 2147483648
    %v260 = vor.u32 1.1754944e-38, %v259
    %v261 = vsel %vm258, %v260, %v256
    %v262 = vmul.f32 1.0, %v261
    %v263 = vsel %vm242, %v243, %v262
    %v264 = vxor.u32 %v239, 2147483648
    %v265 = vmul.f32 %v264, 1.442695
    %v266 = vpow.pop %v265
    %v267 = vadd.f32 %v266, 1.0
    %v268 = vrcp.pop %v267
    %v269 = vmul.f32 %v267, %v268
    %v270 = vsub.f32 1.0, %v269
    %v271 = vmul.f32 %v268, %v270
    %v272 = vadd.f32 %v268, %v271
    %vm273 = vweird.f32 %v267
    %vm274 = vweird.f32 %v268
    %vm275 = vmor %vm273, %vm274
    %v276 = vsel %vm275, %v268, %v272
    %v277 = vand.u32 2147483647, %v267
    %vm278 = vcmp.eq.f32.partialorder %v277, 8.507059e+37
    %v279 = vand.u32 %v267, 2147483648
    %v280 = vor.u32 1.1754944e-38, %v279
    %v281 = vsel %vm278, %v280, %v276
    %v282 = vmul.f32 1.0, %v281
    %v283 = vmul.f32 %v263, %v282
    %v284 = vpack.c.bf16 %v283, %v283
    %v285 = vld [vmem:[#allocation8] sm:$0xf]
    %v286 = vld [vmem:[#allocation8 + $0x4] sm:$0xf]
    %v287 = vld [vmem:[#allocation8 + $0x8] sm:$0xf]
    %v288 = vld [vmem:[#allocation8 + $0xc] sm:$0xf]
    %v289 = vld [vmem:[#allocation8 + $0x10] sm:$0xf]
    %v290 = vld [vmem:[#allocation8 + $0x14] sm:$0xf]
    %v291 = vld [vmem:[#allocation8 + $0x18] sm:$0xf]
    %v292 = vld [vmem:[#allocation8 + $0x1c] sm:$0xf]
    %v293 = vld [vmem:[#allocation8 + $0x20] sm:$0xf]
    %v294 = vld [vmem:[#allocation8 + $0x24] sm:$0xf]
    %v295 = vld [vmem:[#allocation8 + $0x28] sm:$0xf]
    %v296 = vld [vmem:[#allocation8 + $0x2c] sm:$0xf]
    %v297 = vld [vmem:[#allocation8 + $0x30] sm:$0xf]
    %v298 = vld [vmem:[#allocation8 + $0x34] sm:$0xf]
    %v299 = vld [vmem:[#allocation8 + $0x38] sm:$0xf]
    %v300 = vld [vmem:[#allocation8 + $0x3c] sm:$0xf]
    %v317 = vunpack.c.l.b16 %v285
    %v318 = vunpack.c.l.b16 %v286
    %v319 = vunpack.c.l.b16 %v287
    %v320 = vunpack.c.l.b16 %v288
    %v321 = vunpack.c.l.b16 %v289
    %v322 = vunpack.c.l.b16 %v290
    %v323 = vunpack.c.l.b16 %v291
    %v324 = vunpack.c.l.b16 %v292
    %v325 = vunpack.c.l.b16 %v293
    %v326 = vunpack.c.l.b16 %v294
    %v327 = vunpack.c.l.b16 %v295
    %v328 = vunpack.c.l.b16 %v296
    %v329 = vunpack.c.l.b16 %v297
    %v330 = vunpack.c.l.b16 %v298
    %v331 = vunpack.c.l.b16 %v299
    %v332 = vunpack.c.l.b16 %v300
    %v333 = vpack.c.b16 %v318, %v317
    %v334 = vpack.c.b16 %v320, %v319
    %v335 = vpack.c.b16 %v322, %v321
    %v336 = vpack.c.b16 %v324, %v323
    %v337 = vpack.c.b16 %v326, %v325
    %v338 = vpack.c.b16 %v328, %v327
    %v339 = vpack.c.b16 %v330, %v329
    %v340 = vpack.c.b16 %v332, %v331
    %349 = vmatpush.bf16.msra.mxu0 %v340
    %350 = vmatpush.bf16.msra.mxu0 %v339
    %351 = vmatpush.bf16.msra.mxu0 %v338
    %352 = vmatpush.bf16.msra.mxu0 %v337
    %353 = vmatpush.bf16.msra.mxu0 %v336
    %354 = vmatpush.bf16.msra.mxu0 %v335
    %355 = vmatpush.bf16.msra.mxu0 %v334
    %356 = vmatpush.bf16.msra.mxu0 %v333
    %357 = vmatmul.bf16.gmra.mxu0 %v284
    %v358 = vpop.f32.mrf.mxu0
    %v359 = vadd.f32 0.0, %v358
    %v360 = vpop.f32.mrf.mxu0
    %361 = vdwg.mxu0
    %v362 = vld [vmem:[#allocation2] sm:$0x1]
    %v364 = vperm.slane %v362, 0
    %v366 = vadd.f32 %v359, %v364
    %vm367 = vcmask 7168
    %368 = vst.msk [vmem:[%s6] sm:$0xff] %vm367, %v366
    // Predicated region
    $region42: #{gruey_forward.1} parent=1 // pred_check
      _
    $region43: #{gruey_forward.1} parent=1 // pred_check_branch
      %370 = sbr.rel (0) target = $region45
    $region44: #{gruey_forward.1} parent=1 // pred_region
      _
    $region45: #{gruey_forward.1} parent=1 // pred_fallthru
      _
    // Predicated region
    $region46: #{gruey_forward.1} parent=1 // pred_check
      _
    $region47: #{gruey_forward.1} parent=1 // pred_check_branch
      %372 = sbr.rel (0) target = $region49
    $region48: #{gruey_forward.1} parent=1 // pred_region
      _
    $region49: #{gruey_forward.1} parent=1 // pred_fallthru
      _
    %373 = vsyncpa [#allocation4], 1
    %374 = vsyncpa [#allocation6], 1
    %375 = vsyncpa [#allocation9], 1

</llo_original>
